<compile_context>
chip_gen: v7x
topology: tpu7x:2x2x1
jax: 0.10.0
libtpu: 0.0.40
codegen_flags: <defaults>
</compile_context>

<pallas_src>
import math
import functools

import jax
import jax.numpy as jnp
from jax import lax
from jax.experimental import pallas as pl
from jax.experimental.pallas import tpu as pltpu


def _attention_kernel(x_ref, wq_ref, bq_ref, wkv_ref, bkv_ref, o_ref, kv_ref,
                      *, num_heads, head_dim, block_q):
    """One (batch, query-tile) grid step.

    x_ref   : (1, S, H)   activations for this batch row (resident across q-tiles)
    wq_ref  : (H, H)      query weight, [in, out] layout (grid-invariant)
    bq_ref  : (1, H)      query bias
    wkv_ref : (H, 2H)     fused key|value weight, [in, out] layout (grid-invariant)
    bkv_ref : (1, 2H)     fused key|value bias
    o_ref   : (1, tq, H)  lane-dense output tile (heads already interleaved)
    kv_ref  : (2, S, H)   VMEM scratch: K / V for the current batch row
    """
    qi = pl.program_id(1)
    hidden = num_heads * head_dim
    scale = 1.0 / math.sqrt(head_dim)

    # K/V projection once per batch row. The query-tile axis is innermost and
    # "arbitrary", so qi == 0 runs first and the scratch stays valid for the
    # remaining query tiles of this batch row.
    @pl.when(qi == 0)
    def _():
        x_full = x_ref[0]                                          # (S, H)
        kv = jnp.dot(x_full, wkv_ref[...],
                     preferred_element_type=jnp.float32) + bkv_ref[...]
        kv_ref[0] = kv[:, :hidden]                                 # K  (S, H)
        kv_ref[1] = kv[:, hidden:]                                 # V  (S, H)

    # Q projection for this query tile only (whole-hidden-width matmul on MXU).
    row0 = pl.multiple_of(qi * block_q, block_q)
    x_q = x_ref[0, pl.ds(row0, block_q), :]                        # (tq, H)
    q = (jnp.dot(x_q, wq_ref[...], preferred_element_type=jnp.float32)
         + bq_ref[...]) * scale                                    # (tq, H)

    ctx_heads = []
    for h in range(num_heads):                                     # static unroll
        lo = h * head_dim
        hi = lo + head_dim
        q_h = q[:, lo:hi]                                          # (tq, d)
        k_h = kv_ref[0, :, lo:hi]                                  # (S, d)
        v_h = kv_ref[1, :, lo:hi]                                  # (S, d)

        # scores = q_h @ k_h.T without materializing the transpose.
        scores = lax.dot_general(
            q_h, k_h, dimension_numbers=(((1,), (1,)), ((), ())),
            preferred_element_type=jnp.float32)                    # (tq, S)

        m = jnp.max(scores, axis=-1, keepdims=True)
        e = jnp.exp(scores - m)
        denom = jnp.sum(e, axis=-1, keepdims=True)
        probs = e * pl.reciprocal(denom, approx=True)
        # TODO(synk): attention-probs dropout omitted (module run with p=0); a
        # nonzero p needs pltpu.prng_seed / prng_random_bits with a per-call seed.

        ctx_heads.append(jnp.dot(probs, v_h,
                                 preferred_element_type=jnp.float32))  # (tq, d)

    # Heads are already ordered [h, d] along lanes -> single dense (tq, H) store.
    o_ref[0] = jnp.concatenate(ctx_heads, axis=-1).astype(o_ref.dtype)


def bert_self_attention(hidden_states, wq, bq, wk, bk, wv, bv,
                        num_attention_heads, *, block_q=None):
    """Forward pass of BertSelfAttention (inference, dropout disabled).

    hidden_states: (B, S, H) float32
    wq/wk/wv:      (H, H)    float32  (PyTorch nn.Linear layout [out, in])
    bq/bk/bv:      (H,)      float32
    returns:       (B, S, H) float32  == order(batch, query_seq, [heads, features])
    """
    B, S, H = hidden_states.shape
    nh = num_attention_heads
    d = H // nh
    assert nh * d == H, "hidden size must be divisible by num heads"

    # Query-axis tile: full sequence for short S, otherwise ~512-row tiles.
    if block_q is None:
        block_q = S
        for cand in (512, 256, 128):
            if S % cand == 0:
                block_q = cand
                break
    assert S % block_q == 0
    num_q_tiles = S // block_q

    # Host-side weight prep (done once): transpose to [in, out], fuse K|V.
    wq_t = wq.T                                        # (H, H)
    wkv_t = jnp.concatenate([wk.T, wv.T], axis=1)      # (H, 2H)
    bq_r = bq.reshape(1, H)
    bkv_r = jnp.concatenate([bk, bv]).reshape(1, 2 * H)

    kernel = functools.partial(
        _attention_kernel, num_heads=nh, head_dim=d, block_q=block_q)

    return pl.pallas_call(
        kernel,
        out_shape=jax.ShapeDtypeStruct((B, S, H), hidden_states.dtype),
        grid_spec=pltpu.PrefetchScalarGridSpec(
            num_scalar_prefetch=0,
            grid=(B, num_q_tiles),
            in_specs=[
                # activations: constant block index along the inner (q-tile) axis
                pl.BlockSpec((1, S, H), lambda b, qi: (b, 0, 0)),
                # grid-invariant weights / biases
                pl.BlockSpec((H, H), lambda b, qi: (0, 0)),
                pl.BlockSpec((1, H), lambda b, qi: (0, 0)),
                pl.BlockSpec((H, 2 * H), lambda b, qi: (0, 0)),
                pl.BlockSpec((1, 2 * H), lambda b, qi: (0, 0)),
            ],
            out_specs=pl.BlockSpec((1, block_q, H), lambda b, qi: (b, qi, 0)),
            scratch_shapes=[pltpu.VMEM((2, S, H), jnp.float32)],
        ),
        compiler_params=pltpu.CompilerParams(
            dimension_semantics=("parallel", "arbitrary")),
    )(hidden_states, wq_t, bq_r, wkv_t, bkv_r)


def _reference(hidden_states, wq, bq, wk, bk, wv, bv, num_heads):
    # Pure-JAX reference of the PyTorch forward (dropout p=0).
    B, S, H = hidden_states.shape
    d = H // num_heads
    q = hidden_states @ wq.T + bq
    k = hidden_states @ wk.T + bk
    v = hidden_states @ wv.T + bv
    q = q.reshape(B, S, num_heads, d).transpose(0, 2, 1, 3)
    k = k.reshape(B, S, num_heads, d).transpose(0, 2, 1, 3)
    v = v.reshape(B, S, num_heads, d).transpose(0, 2, 1, 3)
    scores = jnp.einsum("bhqd,bhkd->bhqk", q, k) / math.sqrt(d)
    probs = jax.nn.softmax(scores, axis=-1)
    ctx = jnp.einsum("bhqk,bhkd->bhqd", probs, v)
    return ctx.transpose(0, 2, 1, 3).reshape(B, S, H)


if __name__ == "__main__":
    # Small config consistent with the module: hidden=32, heads=4 -> head_dim=8.
    batch, seq, hidden, num_heads = 2, 8, 32, 4
    attention_probs_dropout_prob = 0.0  # dropout disabled (deterministic)

    key = jax.random.PRNGKey(0)
    ks = jax.random.split(key, 7)
    bound = 1.0 / math.sqrt(hidden)  # mimic nn.Linear's uniform init range
    x = jax.random.normal(ks[0], (batch, seq, hidden), dtype=jnp.float32)
    wq = jax.random.uniform(ks[1], (hidden, hidden), jnp.float32, -bound, bound)
    wk = jax.random.uniform(ks[2], (hidden, hidden), jnp.float32, -bound, bound)
    wv = jax.random.uniform(ks[3], (hidden, hidden), jnp.float32, -bound, bound)
    bq = jax.random.uniform(ks[4], (hidden,), jnp.float32, -bound, bound)
    bk = jax.random.uniform(ks[5], (hidden,), jnp.float32, -bound, bound)
    bv = jax.random.uniform(ks[6], (hidden,), jnp.float32, -bound, bound)

    out = bert_self_attention(x, wq, bq, wk, bk, wv, bv, num_heads)
    out = jax.block_until_ready(out)

    ref = _reference(x, wq, bq, wk, bk, wv, bv, num_heads)
    assert out.shape == (batch, seq, hidden)
    # approx=True reciprocal in the softmax -> ~1e-3-level relative tolerance.
    assert jnp.allclose(out, ref, atol=2e-3, rtol=2e-3), "mismatch vs reference"

    print("KERNEL_OK")
</pallas_src>

<mosaic_0001>
module attributes {stable_mosaic.version = 11 : i64} {
  func.func @_attention_kernel(%arg0: i32, %arg1: i32, %arg2: memref<1x8x32xf32, #tpu.memory_space<vmem>>, %arg3: memref<32x32xf32, #tpu.memory_space<vmem>>, %arg4: memref<1x32xf32, #tpu.memory_space<vmem>>, %arg5: memref<32x64xf32, #tpu.memory_space<vmem>>, %arg6: memref<1x64xf32, #tpu.memory_space<vmem>>, %arg7: memref<1x8x32xf32, #tpu.memory_space<vmem>>, %arg8: memref<2x8x32xf32, #tpu.memory_space<vmem>>) attributes {dimension_semantics = [#tpu.dimension_semantics<parallel>, #tpu.dimension_semantics<arbitrary>], iteration_bounds = array<i64: 2, 1>, scalar_prefetch = 0 : i64, scratch_operands = 1 : i64, tpu.core_type = #tpu.core_type<tc>, window_params = [{transform_indices = @transform_0, window_bounds = array<i64: 1, 8, 32>}, {pipeline_mode = #tpu.pipeline_mode<synchronous>, transform_indices = @transform_1, window_bounds = array<i64: 32, 32>}, {pipeline_mode = #tpu.pipeline_mode<synchronous>, transform_indices = @transform_2, window_bounds = array<i64: 1, 32>}, {pipeline_mode = #tpu.pipeline_mode<synchronous>, transform_indices = @transform_3, window_bounds = array<i64: 32, 64>}, {pipeline_mode = #tpu.pipeline_mode<synchronous>, transform_indices = @transform_4, window_bounds = array<i64: 1, 64>}, {transform_indices = @transform_5, window_bounds = array<i64: 1, 8, 32>}]} {
    %c0_i32 = arith.constant 0 : i32
    %0 = arith.cmpi eq, %arg1, %c0_i32 : i32
    %1 = arith.extui %0 : i1 to i32
    %c0_i32_0 = arith.constant 0 : i32
    %2 = arith.cmpi ne, %1, %c0_i32_0 : i32
    scf.if %2 {
      %c0_46 = arith.constant 0 : index
      %c0_47 = arith.constant 0 : index
      %c0_48 = arith.constant 0 : index
      %87 = vector.load %arg2[%c0_46, %c0_47, %c0_48] : memref<1x8x32xf32, #tpu.memory_space<vmem>>, vector<1x8x32xf32>
      %88 = vector.shape_cast %87 : vector<1x8x32xf32> to vector<8x32xf32>
      %c0_49 = arith.constant 0 : index
      %c0_50 = arith.constant 0 : index
      %89 = vector.load %arg5[%c0_49, %c0_50] : memref<32x64xf32, #tpu.memory_space<vmem>>, vector<32x64xf32>
      %cst_51 = arith.constant dense<0.000000e+00> : vector<8x64xf32>
      %90 = tpu.matmul %88, %89, %cst_51 {dimension_numbers = #tpu.dot_dimension_numbers<[1], [0], [0], [1], [0, 0, 1, 1], [], []>} : vector<8x32xf32>, vector<32x64xf32>, vector<8x64xf32> -> vector<8x64xf32>
      %c0_52 = arith.constant 0 : index
      %c0_53 = arith.constant 0 : index
      %91 = vector.load %arg6[%c0_52, %c0_53] : memref<1x64xf32, #tpu.memory_space<vmem>>, vector<1x64xf32>
      %92 = vector.broadcast %91 : vector<1x64xf32> to vector<8x64xf32>
      %93 = arith.addf %90, %92 : vector<8x64xf32>
      %94 = vector.extract_strided_slice %93 {offsets = [0, 0], sizes = [8, 32], strides = [1, 1]} : vector<8x64xf32> to vector<8x32xf32>
      %c0_54 = arith.constant 0 : index
      %c0_55 = arith.constant 0 : index
      %c0_56 = arith.constant 0 : index
      %95 = vector.load %arg8[%c0_54, %c0_55, %c0_56] : memref<2x8x32xf32, #tpu.memory_space<vmem>>, vector<1x8x32xf32>
      %96 = vector.shape_cast %95 : vector<1x8x32xf32> to vector<8x32xf32>
      %97 = vector.shape_cast %94 : vector<8x32xf32> to vector<1x8x32xf32>
      tpu.vector_store %arg8[%c0_54, %c0_55, %c0_56], %97 {strides = array<i32>} : memref<2x8x32xf32, #tpu.memory_space<vmem>>, vector<1x8x32xf32>,
      %98 = vector.extract_strided_slice %93 {offsets = [0, 32], sizes = [8, 32], strides = [1, 1]} : vector<8x64xf32> to vector<8x32xf32>
      %c1_57 = arith.constant 1 : index
      %c0_58 = arith.constant 0 : index
      %c0_59 = arith.constant 0 : index
      %99 = vector.load %arg8[%c1_57, %c0_58, %c0_59] : memref<2x8x32xf32, #tpu.memory_space<vmem>>, vector<1x8x32xf32>
      %100 = vector.shape_cast %99 : vector<1x8x32xf32> to vector<8x32xf32>
      %101 = vector.shape_cast %98 : vector<8x32xf32> to vector<1x8x32xf32>
      tpu.vector_store %arg8[%c1_57, %c0_58, %c0_59], %101 {strides = array<i32>} : memref<2x8x32xf32, #tpu.memory_space<vmem>>, vector<1x8x32xf32>,
    } else {
    }
    %c8_i32 = arith.constant 8 : i32
    %3 = arith.muli %arg1, %c8_i32 : i32
    %4 = tpu.assume_multiple %3, 8 : i32
    %c0 = arith.constant 0 : index
    %5 = arith.index_cast %4 : i32 to index
    %c0_1 = arith.constant 0 : index
    %6 = vector.load %arg2[%c0, %5, %c0_1] : memref<1x8x32xf32, #tpu.memory_space<vmem>>, vector<1x8x32xf32>
    %7 = vector.shape_cast %6 : vector<1x8x32xf32> to vector<8x32xf32>
    %c0_2 = arith.constant 0 : index
    %c0_3 = arith.constant 0 : index
    %8 = vector.load %arg3[%c0_2, %c0_3] : memref<32x32xf32, #tpu.memory_space<vmem>>, vector<32x32xf32>
    %cst = arith.constant dense<0.000000e+00> : vector<8x32xf32>
    %9 = tpu.matmul %7, %8, %cst {dimension_numbers = #tpu.dot_dimension_numbers<[1], [0], [0], [1], [0, 0, 1, 1], [], []>} : vector<8x32xf32>, vector<32x32xf32>, vector<8x32xf32> -> vector<8x32xf32>
    %c0_4 = arith.constant 0 : index
    %c0_5 = arith.constant 0 : index
    %10 = vector.load %arg4[%c0_4, %c0_5] : memref<1x32xf32, #tpu.memory_space<vmem>>, vector<1x32xf32>
    %11 = vector.broadcast %10 : vector<1x32xf32> to vector<8x32xf32>
    %12 = arith.addf %9, %11 : vector<8x32xf32>
    %cst_6 = arith.constant 0.353553385 : f32
    %13 = vector.broadcast %cst_6 : f32 to vector<8x32xf32>
    %14 = arith.mulf %12, %13 : vector<8x32xf32>
    %15 = vector.extract_strided_slice %14 {offsets = [0, 0], sizes = [8, 8], strides = [1, 1]} : vector<8x32xf32> to vector<8x8xf32>
    %c0_7 = arith.constant 0 : index
    %c0_8 = arith.constant 0 : index
    %c0_9 = arith.constant 0 : index
    %16 = vector.load %arg8[%c0_7, %c0_8, %c0_9] : memref<2x8x32xf32, #tpu.memory_space<vmem>>, vector<1x8x8xf32>
    %17 = vector.shape_cast %16 : vector<1x8x8xf32> to vector<8x8xf32>
    %c1 = arith.constant 1 : index
    %c0_10 = arith.constant 0 : index
    %c0_11 = arith.constant 0 : index
    %18 = vector.load %arg8[%c1, %c0_10, %c0_11] : memref<2x8x32xf32, #tpu.memory_space<vmem>>, vector<1x8x8xf32>
    %19 = vector.shape_cast %18 : vector<1x8x8xf32> to vector<8x8xf32>
    %cst_12 = arith.constant dense<0.000000e+00> : vector<8x8xf32>
    %20 = tpu.matmul %15, %17, %cst_12 {dimension_numbers = #tpu.dot_dimension_numbers<[1], [1], [0], [0], [0, 0, 1, 0], [], []>} : vector<8x8xf32>, vector<8x8xf32>, vector<8x8xf32> -> vector<8x8xf32>
    %cst_13 = arith.constant dense<0xFF800000> : vector<8xf32>
    %21 = vector.multi_reduction <maximumf>, %20, %cst_13 [1] : vector<8x8xf32> to vector<8xf32>
    %22 = vector.shape_cast %21 : vector<8xf32> to vector<8x1xf32>
    %23 = vector.broadcast %22 : vector<8x1xf32> to vector<8x8xf32>
    %24 = arith.subf %20, %23 : vector<8x8xf32>
    %25 = math.exp %24 : vector<8x8xf32>
    %cst_14 = arith.constant dense<0.000000e+00> : vector<8xf32>
    %26 = vector.multi_reduction <add>, %25, %cst_14 [1] : vector<8x8xf32> to vector<8xf32>
    %27 = vector.shape_cast %26 : vector<8xf32> to vector<8x1xf32>
    %28 = tpu.reciprocal %27 {approx = true} : vector<8x1xf32> -> vector<8x1xf32>
    %29 = vector.broadcast %28 : vector<8x1xf32> to vector<8x8xf32>
    %30 = arith.mulf %25, %29 : vector<8x8xf32>
    %cst_15 = arith.constant dense<0.000000e+00> : vector<8x8xf32>
    %31 = tpu.matmul %30, %19, %cst_15 {dimension_numbers = #tpu.dot_dimension_numbers<[1], [0], [0], [1], [0, 0, 1, 1], [], []>} : vector<8x8xf32>, vector<8x8xf32>, vector<8x8xf32> -> vector<8x8xf32>
    %32 = vector.extract_strided_slice %14 {offsets = [0, 8], sizes = [8, 8], strides = [1, 1]} : vector<8x32xf32> to vector<8x8xf32>
    %c0_16 = arith.constant 0 : index
    %c0_17 = arith.constant 0 : index
    %c8 = arith.constant 8 : index
    %33 = vector.load %arg8[%c0_16, %c0_17, %c8] : memref<2x8x32xf32, #tpu.memory_space<vmem>>, vector<1x8x8xf32>
    %34 = vector.shape_cast %33 : vector<1x8x8xf32> to vector<8x8xf32>
    %c1_18 = arith.constant 1 : index
    %c0_19 = arith.constant 0 : index
    %c8_20 = arith.constant 8 : index
    %35 = vector.load %arg8[%c1_18, %c0_19, %c8_20] : memref<2x8x32xf32, #tpu.memory_space<vmem>>, vector<1x8x8xf32>
    %36 = vector.shape_cast %35 : vector<1x8x8xf32> to vector<8x8xf32>
    %cst_21 = arith.constant dense<0.000000e+00> : vector<8x8xf32>
    %37 = tpu.matmul %32, %34, %cst_21 {dimension_numbers = #tpu.dot_dimension_numbers<[1], [1], [0], [0], [0, 0, 1, 0], [], []>} : vector<8x8xf32>, vector<8x8xf32>, vector<8x8xf32> -> vector<8x8xf32>
    %cst_22 = arith.constant dense<0xFF800000> : vector<8xf32>
    %38 = vector.multi_reduction <maximumf>, %37, %cst_22 [1] : vector<8x8xf32> to vector<8xf32>
    %39 = vector.shape_cast %38 : vector<8xf32> to vector<8x1xf32>
    %40 = vector.broadcast %39 : vector<8x1xf32> to vector<8x8xf32>
    %41 = arith.subf %37, %40 : vector<8x8xf32>
    %42 = math.exp %41 : vector<8x8xf32>
    %cst_23 = arith.constant dense<0.000000e+00> : vector<8xf32>
    %43 = vector.multi_reduction <add>, %42, %cst_23 [1] : vector<8x8xf32> to vector<8xf32>
    %44 = vector.shape_cast %43 : vector<8xf32> to vector<8x1xf32>
    %45 = tpu.reciprocal %44 {approx = true} : vector<8x1xf32> -> vector<8x1xf32>
    %46 = vector.broadcast %45 : vector<8x1xf32> to vector<8x8xf32>
    %47 = arith.mulf %42, %46 : vector<8x8xf32>
    %cst_24 = arith.constant dense<0.000000e+00> : vector<8x8xf32>
    %48 = tpu.matmul %47, %36, %cst_24 {dimension_numbers = #tpu.dot_dimension_numbers<[1], [0], [0], [1], [0, 0, 1, 1], [], []>} : vector<8x8xf32>, vector<8x8xf32>, vector<8x8xf32> -> vector<8x8xf32>
    %49 = vector.extract_strided_slice %14 {offsets = [0, 16], sizes = [8, 8], strides = [1, 1]} : vector<8x32xf32> to vector<8x8xf32>
    %c0_25 = arith.constant 0 : index
    %c0_26 = arith.constant 0 : index
    %c16 = arith.constant 16 : index
    %50 = vector.load %arg8[%c0_25, %c0_26, %c16] : memref<2x8x32xf32, #tpu.memory_space<vmem>>, vector<1x8x8xf32>
    %51 = vector.shape_cast %50 : vector<1x8x8xf32> to vector<8x8xf32>
    %c1_27 = arith.constant 1 : index
    %c0_28 = arith.constant 0 : index
    %c16_29 = arith.constant 16 : index
    %52 = vector.load %arg8[%c1_27, %c0_28, %c16_29] : memref<2x8x32xf32, #tpu.memory_space<vmem>>, vector<1x8x8xf32>
    %53 = vector.shape_cast %52 : vector<1x8x8xf32> to vector<8x8xf32>
    %cst_30 = arith.constant dense<0.000000e+00> : vector<8x8xf32>
    %54 = tpu.matmul %49, %51, %cst_30 {dimension_numbers = #tpu.dot_dimension_numbers<[1], [1], [0], [0], [0, 0, 1, 0], [], []>} : vector<8x8xf32>, vector<8x8xf32>, vector<8x8xf32> -> vector<8x8xf32>
    %cst_31 = arith.constant dense<0xFF800000> : vector<8xf32>
    %55 = vector.multi_reduction <maximumf>, %54, %cst_31 [1] : vector<8x8xf32> to vector<8xf32>
    %56 = vector.shape_cast %55 : vector<8xf32> to vector<8x1xf32>
    %57 = vector.broadcast %56 : vector<8x1xf32> to vector<8x8xf32>
    %58 = arith.subf %54, %57 : vector<8x8xf32>
    %59 = math.exp %58 : vector<8x8xf32>
    %cst_32 = arith.constant dense<0.000000e+00> : vector<8xf32>
    %60 = vector.multi_reduction <add>, %59, %cst_32 [1] : vector<8x8xf32> to vector<8xf32>
    %61 = vector.shape_cast %60 : vector<8xf32> to vector<8x1xf32>
    %62 = tpu.reciprocal %61 {approx = true} : vector<8x1xf32> -> vector<8x1xf32>
    %63 = vector.broadcast %62 : vector<8x1xf32> to vector<8x8xf32>
    %64 = arith.mulf %59, %63 : vector<8x8xf32>
    %cst_33 = arith.constant dense<0.000000e+00> : vector<8x8xf32>
    %65 = tpu.matmul %64, %53, %cst_33 {dimension_numbers = #tpu.dot_dimension_numbers<[1], [0], [0], [1], [0, 0, 1, 1], [], []>} : vector<8x8xf32>, vector<8x8xf32>, vector<8x8xf32> -> vector<8x8xf32>
    %66 = vector.extract_strided_slice %14 {offsets = [0, 24], sizes = [8, 8], strides = [1, 1]} : vector<8x32xf32> to vector<8x8xf32>
    %c0_34 = arith.constant 0 : index
    %c0_35 = arith.constant 0 : index
    %c24 = arith.constant 24 : index
    %67 = vector.load %arg8[%c0_34, %c0_35, %c24] : memref<2x8x32xf32, #tpu.memory_space<vmem>>, vector<1x8x8xf32>
    %68 = vector.shape_cast %67 : vector<1x8x8xf32> to vector<8x8xf32>
    %c1_36 = arith.constant 1 : index
    %c0_37 = arith.constant 0 : index
    %c24_38 = arith.constant 24 : index
    %69 = vector.load %arg8[%c1_36, %c0_37, %c24_38] : memref<2x8x32xf32, #tpu.memory_space<vmem>>, vector<1x8x8xf32>
    %70 = vector.shape_cast %69 : vector<1x8x8xf32> to vector<8x8xf32>
    %cst_39 = arith.constant dense<0.000000e+00> : vector<8x8xf32>
    %71 = tpu.matmul %66, %68, %cst_39 {dimension_numbers = #tpu.dot_dimension_numbers<[1], [1], [0], [0], [0, 0, 1, 0], [], []>} : vector<8x8xf32>, vector<8x8xf32>, vector<8x8xf32> -> vector<8x8xf32>
    %cst_40 = arith.constant dense<0xFF800000> : vector<8xf32>
    %72 = vector.multi_reduction <maximumf>, %71, %cst_40 [1] : vector<8x8xf32> to vector<8xf32>
    %73 = vector.shape_cast %72 : vector<8xf32> to vector<8x1xf32>
    %74 = vector.broadcast %73 : vector<8x1xf32> to vector<8x8xf32>
    %75 = arith.subf %71, %74 : vector<8x8xf32>
    %76 = math.exp %75 : vector<8x8xf32>
    %cst_41 = arith.constant dense<0.000000e+00> : vector<8xf32>
    %77 = vector.multi_reduction <add>, %76, %cst_41 [1] : vector<8x8xf32> to vector<8xf32>
    %78 = vector.shape_cast %77 : vector<8xf32> to vector<8x1xf32>
    %79 = tpu.reciprocal %78 {approx = true} : vector<8x1xf32> -> vector<8x1xf32>
    %80 = vector.broadcast %79 : vector<8x1xf32> to vector<8x8xf32>
    %81 = arith.mulf %76, %80 : vector<8x8xf32>
    %cst_42 = arith.constant dense<0.000000e+00> : vector<8x8xf32>
    %82 = tpu.matmul %81, %70, %cst_42 {dimension_numbers = #tpu.dot_dimension_numbers<[1], [0], [0], [1], [0, 0, 1, 1], [], []>} : vector<8x8xf32>, vector<8x8xf32>, vector<8x8xf32> -> vector<8x8xf32>
    %83 = tpu.concatenate %31, %48, %65, %82 in 1 : vector<8x8xf32>, vector<8x8xf32>, vector<8x8xf32>, vector<8x8xf32> -> vector<8x32xf32>
    %c0_43 = arith.constant 0 : index
    %c0_44 = arith.constant 0 : index
    %c0_45 = arith.constant 0 : index
    %84 = vector.load %arg7[%c0_43, %c0_44, %c0_45] : memref<1x8x32xf32, #tpu.memory_space<vmem>>, vector<1x8x32xf32>
    %85 = vector.shape_cast %84 : vector<1x8x32xf32> to vector<8x32xf32>
    %86 = vector.shape_cast %83 : vector<8x32xf32> to vector<1x8x32xf32>
    tpu.vector_store %arg7[%c0_43, %c0_44, %c0_45], %86 {strides = array<i32>} : memref<1x8x32xf32, #tpu.memory_space<vmem>>, vector<1x8x32xf32>,
    return
  }
  func.func @transform_0(%arg0: i32, %arg1: i32) -> (i32, i32, i32) {
    %c0_i32 = arith.constant 0 : i32
    %c0_i32_0 = arith.constant 0 : i32
    %c0_i32_1 = arith.constant 0 : i32
    return %arg0, %c0_i32, %c0_i32_0 : i32, i32, i32
  }
  func.func @transform_1(%arg0: i32, %arg1: i32) -> (i32, i32) {
    %c0_i32 = arith.constant 0 : i32
    %c0_i32_0 = arith.constant 0 : i32
    %c0_i32_1 = arith.constant 0 : i32
    return %c0_i32, %c0_i32_0 : i32, i32
  }
  func.func @transform_2(%arg0: i32, %arg1: i32) -> (i32, i32) {
    %c0_i32 = arith.constant 0 : i32
    %c0_i32_0 = arith.constant 0 : i32
    %c0_i32_1 = arith.constant 0 : i32
    return %c0_i32, %c0_i32_0 : i32, i32
  }
  func.func @transform_3(%arg0: i32, %arg1: i32) -> (i32, i32) {
    %c0_i32 = arith.constant 0 : i32
    %c0_i32_0 = arith.constant 0 : i32
    %c0_i32_1 = arith.constant 0 : i32
    return %c0_i32, %c0_i32_0 : i32, i32
  }
  func.func @transform_4(%arg0: i32, %arg1: i32) -> (i32, i32) {
    %c0_i32 = arith.constant 0 : i32
    %c0_i32_0 = arith.constant 0 : i32
    %c0_i32_1 = arith.constant 0 : i32
    return %c0_i32, %c0_i32_0 : i32, i32
  }
  func.func @transform_5(%arg0: i32, %arg1: i32) -> (i32, i32, i32) {
    %c0_i32 = arith.constant 0 : i32
    %c0_i32_0 = arith.constant 0 : i32
    return %arg0, %arg1, %c0_i32 : i32, i32, i32
  }
}

</mosaic_0001>

<llo_original>
// kernel: tpu_custom_call.1
$region0: #{tpu_custom_call.1}
  #allocation0 [shape = 'u32[]', space=smem, size = 0x4, offset = 0x4, fixed_abs, tag = 'smem constant byte address 0x4 - core index']
  #allocation1 [shape = 'u32[144,128]{1,0:T(1,128)}', space=vmem, size = 0x12000, scoped, tag = 'internal scratch']
  #allocation2 [shape = 'f32[2,8,32]{2,1,0:T(8,128)}', space=vmem, size = 0x2000, scoped, tag = 'scratch operand']
  %s0 = inlined_call_operand.hbm [shape: f32[2,8,32], index: 0, kind: input, shape index: {}]
  %s1 = inlined_call_operand.hbm [shape: f32[32,32], index: 1, kind: input, shape index: {}]
  %s2 = inlined_call_operand.vmem [shape: f32[1,32], index: 2, kind: input, shape index: {}]
  %s3 = inlined_call_operand.hbm [shape: f32[32,64], index: 3, kind: input, shape index: {}]
  %s4 = inlined_call_operand.vmem [shape: f32[1,64], index: 4, kind: input, shape index: {}]
  %s5 = inlined_call_operand.hbm [shape: f32[2,8,32], index: 5, kind: output, shape index: {}]
  %s6 = sld [smem:[#allocation0]]
  $region69: #{tpu_custom_call.1} parent=0
    _
  %s8 = ssub.s32 1, %s6
  %s9 = scalar_select 0, %s8, %s6
  $region1: #{tpu_custom_call.1} parent=0
    #allocation3 [shape = 'u8[8192]{0}', space=vmem, size = 0x2000, scoped, tag = 'input window, operand 0']
    #allocation4 [shape = 's32[2]{0}', space=sflag, size = 0x8, scoped, tag = 'scoped memory for tpu_custom_call.1']
    #allocation5 [shape = 's32[2]{0}', space=sflag, size = 0x8, scoped, tag = 'scoped memory for tpu_custom_call.1']
    #allocation6 [shape = 'u8[16384]{0}', space=vmem, size = 0x4000, scoped, tag = 'input window, operand 1, single buffered']
    #allocation7 [shape = 's32[1]{0}', space=sflag, size = 0x4, scoped, tag = 'scoped memory for tpu_custom_call.1']
    #allocation8 [shape = 'u8[16384]{0}', space=vmem, size = 0x4000, scoped, tag = 'input window, operand 3, single buffered']
    #allocation9 [shape = 'u8[8192]{0}', space=vmem, size = 0x2000, scoped, tag = 'output window, operand 0']
    %10 = vsyncpa [#allocation4], 0
    %s11 = scalar_lea.sflag [#allocation4], 1
    %12 = vsyncpa %s11, 0
    %13 = vsyncpa [#allocation7], 0
    %14 = vsyncpa [#allocation5], 0
    %s15 = scalar_lea.sflag [#allocation5], 1
    %16 = vsyncpa %s15, 0
    loop: start=0, step=1, limit=4
    $region2: #{tpu_custom_call.1} parent=1 // loop_pre_header
      _
    $region3: #{tpu_custom_call.1} parent=1 // loop_header
      %s18 = sphi 0, %s22
      %p19 = scmp.ge.s32.totalorder %s18, 4
      %s25 = sphi 0, %s37
      %s26 = sphi 0, %s33
      %s27 = sphi 0, %s25
      %s28 = sphi 0, %s26
      %s29 = sphi 0, %s27
      %s30 = sphi 0, %s28
      %s40 = sphi 0, %s42
      %s43 = sphi 0, %s40
      %s44 = sphi 0, %s43
      %s60 = sphi 0, %s44
      %s64 = sphi 0, %s64
      %s66 = sphi 0, %s64
      %s67 = sphi 0, %s66
      %s81 = sphi 0, %s67
      %s85 = sphi 0, %s85
      %s87 = sphi 0, %s85
      %s88 = sphi 0, %s87
      %s102 = sphi 0, %s88
      %s106 = sphi 0, %s106
      %s108 = sphi 0, %s106
      %s109 = sphi 0, %s108
      %s123 = sphi 0, %s109
      %s127 = sphi 0, %s127
      %s129 = sphi 0, %s127
      %s130 = sphi 0, %s129
      %s144 = sphi 0, %s130
      %s152 = sphi 0, %s154
      %s155 = sphi 0, %s152
      %s156 = sphi 0, %s155
      %s172 = sphi 0, %s156
    $region4: #{tpu_custom_call.1} parent=1 // loop_header_branch
      %21 = sbr.rel (%p19) target = $region8
    $region5: #{tpu_custom_call.1} parent=1 // loop_body
      %s23 = ssub.s32 %s18, 1
      %s24 = ssub.s32 %s18, 2
      %s31 = sadd.s32 1, %s26
      %p32 = scmp.ge.s32.totalorder %s31, 1
      %s33 = scalar_select %p32, 0, %s31
      %s34 = sadd.s32 1, %s25
      %s35 = scalar_select %p32, %s34, %s25
      %p36 = scmp.ge.s32.totalorder %s35, 2
      %s37 = scalar_select %p36, 0, %s35
      %s38 = ssub.s32 %s25, %s37
      %p39 = scmp.eq.s32.totalorder %s38, 0
      %s41 = sadd.s32 %s40, 1
      %s42 = scalar_select %p39, %s40, %s41
      %p45 = pneg %p39
      %p46 = scmp.eq.s32.totalorder %s18, 1
      %p47 = por %p45, %p46
      %p48 = scmp.ne.s32.totalorder %s40, %s43
      %p49 = scmp.eq.s32.totalorder %s18, 0
      %p50 = por %p48, %p49
      %p51 = scmp.ne.s32.totalorder %s40, %s43
      %p52 = scmp.eq.s32.totalorder %s23, 1
      %p53 = por %p51, %p52
      %p54 = scmp.ne.s32.totalorder %s43, %s44
      %p55 = scmp.eq.s32.totalorder %s23, 0
      %p56 = por %p54, %p55
      %p57 = scmp.ne.s32.totalorder %s43, %s44
      %p58 = scmp.eq.s32.totalorder %s24, 1
      %p59 = por %p57, %p58
      %p61 = scmp.ne.s32.totalorder %s44, %s60
      %p62 = scmp.eq.s32.totalorder %s24, 0
      %p63 = por %p61, %p62
      %s65 = sadd.s32 %s64, 1
      %p68 = scmp.eq.s32.totalorder %s18, 1
      %p69 = scmp.ne.s32.totalorder %s64, %s66
      %p70 = scmp.eq.s32.totalorder %s18, 0
      %p71 = por %p69, %p70
      %p72 = scmp.ne.s32.totalorder %s64, %s66
      %p73 = scmp.eq.s32.totalorder %s23, 1
      %p74 = por %p72, %p73
      %p75 = scmp.ne.s32.totalorder %s66, %s67
      %p76 = scmp.eq.s32.totalorder %s23, 0
      %p77 = por %p75, %p76
      %p78 = scmp.ne.s32.totalorder %s66, %s67
      %p79 = scmp.eq.s32.totalorder %s24, 1
      %p80 = por %p78, %p79
      %p82 = scmp.ne.s32.totalorder %s67, %s81
      %p83 = scmp.eq.s32.totalorder %s24, 0
      %p84 = por %p82, %p83
      %s86 = sadd.s32 %s85, 1
      %p89 = scmp.eq.s32.totalorder %s18, 1
      %p90 = scmp.ne.s32.totalorder %s85, %s87
      %p91 = scmp.eq.s32.totalorder %s18, 0
      %p92 = por %p90, %p91
      %p93 = scmp.ne.s32.totalorder %s85, %s87
      %p94 = scmp.eq.s32.totalorder %s23, 1
      %p95 = por %p93, %p94
      %p96 = scmp.ne.s32.totalorder %s87, %s88
      %p97 = scmp.eq.s32.totalorder %s23, 0
      %p98 = por %p96, %p97
      %p99 = scmp.ne.s32.totalorder %s87, %s88
      %p100 = scmp.eq.s32.totalorder %s24, 1
      %p101 = por %p99, %p100
      %p103 = scmp.ne.s32.totalorder %s88, %s102
      %p104 = scmp.eq.s32.totalorder %s24, 0
      %p105 = por %p103, %p104
      %s107 = sadd.s32 %s106, 1
      %p110 = scmp.eq.s32.totalorder %s18, 1
      %p111 = scmp.ne.s32.totalorder %s106, %s108
      %p112 = scmp.eq.s32.totalorder %s18, 0
      %p113 = por %p111, %p112
      %p114 = scmp.ne.s32.totalorder %s106, %s108
      %p115 = scmp.eq.s32.totalorder %s23, 1
      %p116 = por %p114, %p115
      %p117 = scmp.ne.s32.totalorder %s108, %s109
      %p118 = scmp.eq.s32.totalorder %s23, 0
      %p119 = por %p117, %p118
      %p120 = scmp.ne.s32.totalorder %s108, %s109
      %p121 = scmp.eq.s32.totalorder %s24, 1
      %p122 = por %p120, %p121
      %p124 = scmp.ne.s32.totalorder %s109, %s123
      %p125 = scmp.eq.s32.totalorder %s24, 0
      %p126 = por %p124, %p125
      %s128 = sadd.s32 %s127, 1
      %p131 = scmp.eq.s32.totalorder %s18, 1
      %p132 = scmp.ne.s32.totalorder %s127, %s129
      %p133 = scmp.eq.s32.totalorder %s18, 0
      %p134 = por %p132, %p133
      %p135 = scmp.ne.s32.totalorder %s127, %s129
      %p136 = scmp.eq.s32.totalorder %s23, 1
      %p137 = por %p135, %p136
      %p138 = scmp.ne.s32.totalorder %s129, %s130
      %p139 = scmp.eq.s32.totalorder %s23, 0
      %p140 = por %p138, %p139
      %p141 = scmp.ne.s32.totalorder %s129, %s130
      %p142 = scmp.eq.s32.totalorder %s24, 1
      %p143 = por %p141, %p142
      %p145 = scmp.ne.s32.totalorder %s130, %s144
      %p146 = scmp.eq.s32.totalorder %s24, 0
      %p147 = por %p145, %p146
      %s148 = ssub.s32 %s25, %s37
      %s149 = ssub.s32 %s26, %s33
      %s150 = sor.u32 %s148, %s149
      %p151 = scmp.eq.s32.totalorder %s150, 0
      %s153 = sadd.s32 %s152, 1
      %s154 = scalar_select %p151, %s152, %s153
      %p157 = pneg %p151
      %p158 = scmp.eq.s32.totalorder %s18, 1
      %p159 = por %p157, %p158
      %p160 = scmp.ne.s32.totalorder %s152, %s155
      %p161 = scmp.eq.s32.totalorder %s18, 0
      %p162 = por %p160, %p161
      %p163 = scmp.ne.s32.totalorder %s152, %s155
      %p164 = scmp.eq.s32.totalorder %s23, 1
      %p165 = por %p163, %p164
      %p166 = scmp.ne.s32.totalorder %s155, %s156
      %p167 = scmp.eq.s32.totalorder %s23, 0
      %p168 = por %p166, %p167
      %p169 = scmp.ne.s32.totalorder %s155, %s156
      %p170 = scmp.eq.s32.totalorder %s24, 1
      %p171 = por %p169, %p170
      %p173 = scmp.ne.s32.totalorder %s156, %s172
      %p174 = scmp.eq.s32.totalorder %s24, 0
      %p175 = por %p173, %p174
      %p176 = scmp.le.s32.totalorder 1, %s18
      %p177 = scmp.lt.s32.totalorder %s18, 3
      %p178 = pnand %p176, %p177
      %p179 = pneg %p178
      // Predicated region
      $region9: #{tpu_custom_call.1} parent=5 // pred_check
        _
      $region10: #{tpu_custom_call.1} parent=5 // pred_check_branch
        %181 = sbr.rel (%p178) target = $region12
      $region11: #{tpu_custom_call.1} parent=5 // pred_region
        %s182 = ssub.s32 %s18, 1
        // Predicated region
        $region13: #{tpu_custom_call.1} parent=11 // pred_check
          %p183 = pneg %p77
        $region14: #{tpu_custom_call.1} parent=11 // pred_check_branch
          %185 = sbr.rel (%p183) target = $region16
        $region15: #{tpu_custom_call.1} parent=11 // pred_region
          %s187 = ssub.s32 512, 512
          %188 = vsyncadd [#allocation7], %s187
          %s189 = sshll.u32 [#allocation6], 4
          %s190 = int_to_ptr.vmem [resolvable:$true] %s189
          %195 = dma.hbm_to_vmem [thread:$0]  %s1, 512, %s190, [#allocation7], 128, 128, 8
        $region16: #{tpu_custom_call.1} parent=11 // pred_fallthru
          _
        // Predicated region
        $region17: #{tpu_custom_call.1} parent=11 // pred_check
          %p196 = pneg %p98
        $region18: #{tpu_custom_call.1} parent=11 // pred_check_branch
          %198 = sbr.rel (%p196) target = $region20
        $region19: #{tpu_custom_call.1} parent=11 // pred_region
          _
        $region20: #{tpu_custom_call.1} parent=11 // pred_fallthru
          _
        // Predicated region
        $region21: #{tpu_custom_call.1} parent=11 // pred_check
          %p199 = pneg %p119
        $region22: #{tpu_custom_call.1} parent=11 // pred_check_branch
          %201 = sbr.rel (%p199) target = $region24
        $region23: #{tpu_custom_call.1} parent=11 // pred_region
          %s203 = ssub.s32 512, 512
          %204 = vsyncadd [#allocation7], %s203
          %s205 = sshll.u32 [#allocation8], 4
          %s206 = int_to_ptr.vmem [resolvable:$true] %s205
          %211 = dma.hbm_to_vmem [thread:$0]  %s3, 512, %s206, [#allocation7], 128, 128, 8
        $region24: #{tpu_custom_call.1} parent=11 // pred_fallthru
          _
        // Predicated region
        $region25: #{tpu_custom_call.1} parent=11 // pred_check
          %p212 = pneg %p140
        $region26: #{tpu_custom_call.1} parent=11 // pred_check_branch
          %214 = sbr.rel (%p212) target = $region28
        $region27: #{tpu_custom_call.1} parent=11 // pred_region
          _
        $region28: #{tpu_custom_call.1} parent=11 // pred_fallthru
          _
      $region12: #{tpu_custom_call.1} parent=5 // pred_fallthru
        _
      %p215 = scmp.lt.s32.totalorder %s18, 2
      // Predicated region
      $region29: #{tpu_custom_call.1} parent=5 // pred_check
        %p216 = pneg %p215
      $region30: #{tpu_custom_call.1} parent=5 // pred_check_branch
        %218 = sbr.rel (%p216) target = $region32
      $region31: #{tpu_custom_call.1} parent=5 // pred_region
        // Predicated region
        $region33: #{tpu_custom_call.1} parent=31 // pred_check
          %p219 = pneg %p50
        $region34: #{tpu_custom_call.1} parent=31 // pred_check_branch
          %221 = sbr.rel (%p219) target = $region36
        $region35: #{tpu_custom_call.1} parent=31 // pred_region
          %s222 = sand.u32 %s40, 1
          %s223 = scalar_lea.sflag [#allocation4], %s222
          %s224 = sand.u32 %s40, 1
          %s225 = smul.addr %s224, 8
          %s226 = scalar_lea.vmem [#allocation3], %s225
          %s228 = ssub.s32 128, 128
          %229 = vsyncadd %s223, %s228
          %s230 = smul.addr %s25, 128
          %s231 = scalar_lea.hbm %s0, %s230
          %s233 = sshll.u32 %s226, 4
          %s234 = int_to_ptr.vmem [resolvable:$true] %s233
          %236 = dma.hbm_to_vmem [thread:$0]  %s231, 128, %s234, %s223
        $region36: #{tpu_custom_call.1} parent=31 // pred_fallthru
          _
      $region32: #{tpu_custom_call.1} parent=5 // pred_fallthru
        _
      %p237 = scmp.le.s32.totalorder 1, %s18
      %p238 = scmp.lt.s32.totalorder %s18, 3
      %p239 = pnand %p237, %p238
      %p240 = pneg %p239
      // Predicated region
      $region37: #{tpu_custom_call.1} parent=5 // pred_check
        _
      $region38: #{tpu_custom_call.1} parent=5 // pred_check_branch
        %242 = sbr.rel (%p239) target = $region40
      $region39: #{tpu_custom_call.1} parent=5 // pred_region
        %s243 = ssub.s32 %s18, 1
        %s244 = sand.u32 %s43, 1
        %s245 = scalar_lea.sflag [#allocation4], %s244
        %s246 = sand.u32 %s43, 1
        %s247 = smul.addr %s246, 8
        %s248 = scalar_lea.vmem [#allocation3], %s247
        // Predicated region
        $region41: #{tpu_custom_call.1} parent=39 // pred_check
          %p249 = pneg %p56
        $region42: #{tpu_custom_call.1} parent=39 // pred_check_branch
          %251 = sbr.rel (%p249) target = $region44
        $region43: #{tpu_custom_call.1} parent=39 // pred_region
          %252 = dma.done %s245, 128
        $region44: #{tpu_custom_call.1} parent=39 // pred_fallthru
          _
        // Predicated region
        $region45: #{tpu_custom_call.1} parent=39 // pred_check
          %p253 = pneg %p77
        $region46: #{tpu_custom_call.1} parent=39 // pred_check_branch
          %255 = sbr.rel (%p253) target = $region48
        $region47: #{tpu_custom_call.1} parent=39 // pred_region
          %256 = dma.done [#allocation7], 512
        $region48: #{tpu_custom_call.1} parent=39 // pred_fallthru
          _
        // Predicated region
        $region49: #{tpu_custom_call.1} parent=39 // pred_check
          %p257 = pneg %p119
        $region50: #{tpu_custom_call.1} parent=39 // pred_check_branch
          %259 = sbr.rel (%p257) target = $region52
        $region51: #{tpu_custom_call.1} parent=39 // pred_region
          %260 = dma.done [#allocation7], 512
        $region52: #{tpu_custom_call.1} parent=39 // pred_fallthru
          _
        %s261 = sand.u32 %s43, 1
        %s262 = scalar_lea.sflag [#allocation4], %s261
        %s263 = sand.u32 %s43, 1
        %s264 = smul.addr %s263, 8
        %s265 = scalar_lea.vmem [#allocation3], %s264
        %p266 = pneg %p56
        %p267 = pneg %p53
        %p268 = pneg %p77
        %p269 = pneg %p74
        %p270 = pneg %p98
        %p271 = pneg %p95
        %p272 = pneg %p119
        %p273 = pneg %p116
        %p274 = pneg %p140
        %p275 = pneg %p137
        %p276 = pneg %p168
        %p277 = pneg %p165
        %s278 = sand.u32 %s155, 1
        %s279 = scalar_lea.sflag [#allocation5], %s278
        %s280 = sand.u32 %s155, 1
        %s281 = smul.addr %s280, 8
        %s282 = scalar_lea.vmem [#allocation9], %s281
        %p283 = scmp.eq.s32.totalorder %s28, 0
        // Predicated region
        $region53: #{tpu_custom_call.1} parent=39 // pred_check
          %p284 = pneg %p283
        $region54: #{tpu_custom_call.1} parent=39 // pred_check_branch
          %286 = sbr.rel (%p284) target = $region56
        $region55: #{tpu_custom_call.1} parent=39 // pred_region
          %v287 = vld [vmem:[%s248] sm:$0xff]
          %v288 = vld [vmem:[#allocation8] sm:$0xff]
          %v289 = vld [vmem:[#allocation8 + $0x8] sm:$0xff]
          %v290 = vld [vmem:[#allocation8 + $0x10] sm:$0xff]
          %v291 = vld [vmem:[#allocation8 + $0x18] sm:$0xff]
          %v292 = vld [vmem:[%s4] sm:$0x1]
          %v294 = vlaneseq
          %v295 = vshrl.u32 %v294, 7
          %v296 = vsub.s32 0, %v295
          %v297 = vrot.slane %v292, %v296
          %vm299 = vcmask 261120
          %v301 = vsel %vm299, %v287, 0
          %303 = vmatprep.subr.mxu0 0.0
          %304 = vmatpush1.msra.mxu0 %v288
          %305 = vmatprep.subr.mxu0 0.0
          %306 = vmatpush1.msra.mxu0 %v289
          %307 = vmatprep.subr.mxu0 0.0
          %308 = vmatpush1.msra.mxu0 %v290
          %309 = vmatprep.subr.mxu0 0.0
          %310 = vmatpush1.msra.mxu0 %v291
          %311 = vmatprep.subr.mxu0 0.0
          %312 = vmatpush1.msra.mxu0 0.0
          %313 = vmatprep.subr.mxu0 0.0
          %314 = vmatpush1.msra.mxu0 0.0
          %315 = vmatprep.subr.mxu0 0.0
          %316 = vmatpush1.msra.mxu0 0.0
          %317 = vmatprep.subr.mxu0 0.0
          %318 = vmatpush1.msra.mxu0 0.0
          %319 = vmatprep.subr.mxu0 0.0
          %320 = vmatpush1.msra.mxu0 0.0
          %321 = vmatprep.subr.mxu0 0.0
          %322 = vmatpush1.msra.mxu0 0.0
          %323 = vmatprep.subr.mxu0 0.0
          %324 = vmatpush1.msra.mxu0 0.0
          %325 = vmatprep.subr.mxu0 0.0
          %326 = vmatpush1.msra.mxu0 0.0
          %327 = vmatprep.subr.mxu0 0.0
          %328 = vmatpush1.msra.mxu0 0.0
          %329 = vmatprep.subr.mxu0 0.0
          %330 = vmatpush1.msra.mxu0 0.0
          %331 = vmatprep.subr.mxu0 0.0
          %332 = vmatpush1.msra.mxu0 0.0
          %333 = vmatprep.subr.mxu0 0.0
          %334 = vmatpush1.msra.mxu0 0.0
          %335 = vmatprep.subr.mxu0 0.0
          %336 = vmatpush1.msra.mxu0 0.0
          %337 = vmatprep.subr.mxu0 0.0
          %338 = vmatpush1.msra.mxu0 0.0
          %339 = vmatprep.subr.mxu0 0.0
          %340 = vmatpush1.msra.mxu0 0.0
          %341 = vmatprep.subr.mxu0 0.0
          %342 = vmatpush1.msra.mxu0 0.0
          %343 = vmatprep.subr.mxu0 0.0
          %344 = vmatpush1.msra.mxu0 0.0
          %345 = vmatprep.subr.mxu0 0.0
          %346 = vmatpush1.msra.mxu0 0.0
          %347 = vmatprep.subr.mxu0 0.0
          %348 = vmatpush1.msra.mxu0 0.0
          %349 = vmatprep.subr.mxu0 0.0
          %350 = vmatpush1.msra.mxu0 0.0
          %351 = vmatprep.subr.mxu0 0.0
          %352 = vmatpush1.msra.mxu0 0.0
          %353 = vmatprep.subr.mxu0 0.0
          %354 = vmatpush1.msra.mxu0 0.0
          %355 = vmatprep.subr.mxu0 0.0
          %356 = vmatpush1.msra.mxu0 0.0
          %357 = vmatprep.subr.mxu0 0.0
          %358 = vmatpush1.msra.mxu0 0.0
          %359 = vmatprep.subr.mxu0 0.0
          %360 = vmatpush1.msra.mxu0 0.0
          %361 = vmatprep.subr.mxu0 0.0
          %362 = vmatpush1.msra.mxu0 0.0
          %363 = vmatprep.subr.mxu0 0.0
          %364 = vmatpush1.msra.mxu0 0.0
          %365 = vmatprep.subr.mxu0 0.0
          %366 = vmatpush1.msra.mxu0 0.0
          %367 = vmatprep.mubr.f32.mxu0 0.0
          %368 = vmatmul.mubr.f32.gmra.mrb[0].mxu0 %v301
          %v369 = vpop.f32.mrb[0].mxu0
          %v370 = vadd.f32 %v297, %v369
          %v371 = vpop.f32.mrb[0].mxu0
          %372 = vdwg.mxu0
          %373 = vst.msk [vmem:[#allocation2] sm:$0xff] %vm299, %v370
          %375 = vrot.lane.b32.xlu0 %v370, 96
          %v376 = vpop.permute.xlu0 %375
          %s378 = scalar_lea.vmem [#allocation2], 8
          %379 = vst.msk [vmem:[%s378] sm:$0xff] %vm299, %v376
        $region56: #{tpu_custom_call.1} parent=39 // pred_fallthru
          _
        %s380 = smul.u32 %s28, 8
        %s381 = scalar_lea.vmem %s248, %s380 [#allocation3]
        %v382 = vld [vmem:[%s381] sm:$0xff]
        %v383 = vld [vmem:[#allocation6] sm:$0xff]
        %v384 = vld [vmem:[#allocation6 + $0x8] sm:$0xff]
        %v385 = vld [vmem:[#allocation6 + $0x10] sm:$0xff]
        %v386 = vld [vmem:[#allocation6 + $0x18] sm:$0xff]
        %v387 = vld [vmem:[%s2] sm:$0x1]
        %v389 = vlaneseq
        %v390 = vshrl.u32 %v389, 7
        %v391 = vsub.s32 0, %v390
        %v392 = vrot.slane %v387, %v391
        %vm394 = vcmask 261120
        %v396 = vsel %vm394, %v382, 0
        %398 = vmatprep.subr.mxu0 0.0
        %399 = vmatpush1.msra.mxu0 %v383
        %400 = vmatprep.subr.mxu0 0.0
        %401 = vmatpush1.msra.mxu0 %v384
        %402 = vmatprep.subr.mxu0 0.0
        %403 = vmatpush1.msra.mxu0 %v385
        %404 = vmatprep.subr.mxu0 0.0
        %405 = vmatpush1.msra.mxu0 %v386
        %406 = vmatprep.subr.mxu0 0.0
        %407 = vmatpush1.msra.mxu0 0.0
        %408 = vmatprep.subr.mxu0 0.0
        %409 = vmatpush1.msra.mxu0 0.0
        %410 = vmatprep.subr.mxu0 0.0
        %411 = vmatpush1.msra.mxu0 0.0
        %412 = vmatprep.subr.mxu0 0.0
        %413 = vmatpush1.msra.mxu0 0.0
        %414 = vmatprep.subr.mxu0 0.0
        %415 = vmatpush1.msra.mxu0 0.0
        %416 = vmatprep.subr.mxu0 0.0
        %417 = vmatpush1.msra.mxu0 0.0
        %418 = vmatprep.subr.mxu0 0.0
        %419 = vmatpush1.msra.mxu0 0.0
        %420 = vmatprep.subr.mxu0 0.0
        %421 = vmatpush1.msra.mxu0 0.0
        %422 = vmatprep.subr.mxu0 0.0
        %423 = vmatpush1.msra.mxu0 0.0
        %424 = vmatprep.subr.mxu0 0.0
        %425 = vmatpush1.msra.mxu0 0.0
        %426 = vmatprep.subr.mxu0 0.0
        %427 = vmatpush1.msra.mxu0 0.0
        %428 = vmatprep.subr.mxu0 0.0
        %429 = vmatpush1.msra.mxu0 0.0
        %430 = vmatprep.subr.mxu0 0.0
        %431 = vmatpush1.msra.mxu0 0.0
        %432 = vmatprep.subr.mxu0 0.0
        %433 = vmatpush1.msra.mxu0 0.0
        %434 = vmatprep.subr.mxu0 0.0
        %435 = vmatpush1.msra.mxu0 0.0
        %436 = vmatprep.subr.mxu0 0.0
        %437 = vmatpush1.msra.mxu0 0.0
        %438 = vmatprep.subr.mxu0 0.0
        %439 = vmatpush1.msra.mxu0 0.0
        %440 = vmatprep.subr.mxu0 0.0
        %441 = vmatpush1.msra.mxu0 0.0
        %442 = vmatprep.subr.mxu0 0.0
        %443 = vmatpush1.msra.mxu0 0.0
        %444 = vmatprep.subr.mxu0 0.0
        %445 = vmatpush1.msra.mxu0 0.0
        %446 = vmatprep.subr.mxu0 0.0
        %447 = vmatpush1.msra.mxu0 0.0
        %448 = vmatprep.subr.mxu0 0.0
        %449 = vmatpush1.msra.mxu0 0.0
        %450 = vmatprep.subr.mxu0 0.0
        %451 = vmatpush1.msra.mxu0 0.0
        %452 = vmatprep.subr.mxu0 0.0
        %453 = vmatpush1.msra.mxu0 0.0
        %454 = vmatprep.subr.mxu0 0.0
        %455 = vmatpush1.msra.mxu0 0.0
        %456 = vmatprep.subr.mxu0 0.0
        %457 = vmatpush1.msra.mxu0 0.0
        %458 = vmatprep.subr.mxu0 0.0
        %459 = vmatpush1.msra.mxu0 0.0
        %460 = vmatprep.subr.mxu0 0.0
        %461 = vmatpush1.msra.mxu0 0.0
        %462 = vmatprep.mubr.f32.mxu0 0.0
        %463 = vmatmul.mubr.f32.gmra.mrb[0].mxu0 %v396
        %v464 = vpop.f32.mrb[0].mxu0
        %v465 = vadd.f32 %v392, %v464
        %v466 = vpop.f32.mrb[0].mxu0
        %467 = vdwg.mxu0
        %v468 = vmul.f32 %v465, 0.35355338
        %v469 = vld [vmem:[#allocation2] sm:$0xff]
        %s470 = scalar_lea.vmem [#allocation2], 8
        %v471 = vld [vmem:[%s470] sm:$0xff]
        %vm472 = vcmask 64512
        %v474 = vsel %vm472, %v468, 0
        %v477 = vsel %vm472, %v469, 0
        %479 = vmatprep.subr.mxu0 0.0
        %480 = vmatpush1.xpose.msra.mxu0 %v477
        %481 = vmatprep.subr.mxu0 0.0
        %482 = vmatpush1.xpose.msra.mxu0 0.0
        %483 = vmatprep.subr.mxu0 0.0
        %484 = vmatpush1.xpose.msra.mxu0 0.0
        %485 = vmatprep.subr.mxu0 0.0
        %486 = vmatpush1.xpose.msra.mxu0 0.0
        %487 = vmatprep.subr.mxu0 0.0
        %488 = vmatpush1.xpose.msra.mxu0 0.0
        %489 = vmatprep.subr.mxu0 0.0
        %490 = vmatpush1.xpose.msra.mxu0 0.0
        %491 = vmatprep.subr.mxu0 0.0
        %492 = vmatpush1.xpose.msra.mxu0 0.0
        %493 = vmatprep.subr.mxu0 0.0
        %494 = vmatpush1.xpose.msra.mxu0 0.0
        %495 = vmatprep.subr.mxu0 0.0
        %496 = vmatpush1.xpose.msra.mxu0 0.0
        %497 = vmatprep.subr.mxu0 0.0
        %498 = vmatpush1.xpose.msra.mxu0 0.0
        %499 = vmatprep.subr.mxu0 0.0
        %500 = vmatpush1.xpose.msra.mxu0 0.0
        %501 = vmatprep.subr.mxu0 0.0
        %502 = vmatpush1.xpose.msra.mxu0 0.0
        %503 = vmatprep.subr.mxu0 0.0
        %504 = vmatpush1.xpose.msra.mxu0 0.0
        %505 = vmatprep.subr.mxu0 0.0
        %506 = vmatpush1.xpose.msra.mxu0 0.0
        %507 = vmatprep.subr.mxu0 0.0
        %508 = vmatpush1.xpose.msra.mxu0 0.0
        %509 = vmatprep.subr.mxu0 0.0
        %510 = vmatpush1.xpose.msra.mxu0 0.0
        %511 = vmatprep.subr.mxu0 0.0
        %512 = vmatpush1.xpose.msra.mxu0 0.0
        %513 = vmatprep.subr.mxu0 0.0
        %514 = vmatpush1.xpose.msra.mxu0 0.0
        %515 = vmatprep.subr.mxu0 0.0
        %516 = vmatpush1.xpose.msra.mxu0 0.0
        %517 = vmatprep.subr.mxu0 0.0
        %518 = vmatpush1.xpose.msra.mxu0 0.0
        %519 = vmatprep.subr.mxu0 0.0
        %520 = vmatpush1.xpose.msra.mxu0 0.0
        %521 = vmatprep.subr.mxu0 0.0
        %522 = vmatpush1.xpose.msra.mxu0 0.0
        %523 = vmatprep.subr.mxu0 0.0
        %524 = vmatpush1.xpose.msra.mxu0 0.0
        %525 = vmatprep.subr.mxu0 0.0
        %526 = vmatpush1.xpose.msra.mxu0 0.0
        %527 = vmatprep.subr.mxu0 0.0
        %528 = vmatpush1.xpose.msra.mxu0 0.0
        %529 = vmatprep.subr.mxu0 0.0
        %530 = vmatpush1.xpose.msra.mxu0 0.0
        %531 = vmatprep.subr.mxu0 0.0
        %532 = vmatpush1.xpose.msra.mxu0 0.0
        %533 = vmatprep.subr.mxu0 0.0
        %534 = vmatpush1.xpose.msra.mxu0 0.0
        %535 = vmatprep.subr.mxu0 0.0
        %536 = vmatpush1.xpose.msra.mxu0 0.0
        %537 = vmatprep.subr.mxu0 0.0
        %538 = vmatpush1.xpose.msra.mxu0 0.0
        %539 = vmatprep.subr.mxu0 0.0
        %540 = vmatpush1.xpose.msra.mxu0 0.0
        %541 = vmatprep.subr.mxu0 0.0
        %542 = vmatpush1.xpose.msra.mxu0 0.0
        %543 = vmatprep.mubr.f32.mxu0 0.0
        %544 = vmatmul.mubr.f32.gmra.mrb[0].mxu0 %v474
        %v545 = vpop.f32.mrb[0].mxu0
        %v546 = vadd.f32 0.0, %v545
        %v547 = vpop.f32.mrb[0].mxu0
        %548 = vdwg.mxu0
        %v549 = vsel %vm472, %v546, -inf
        %550 = vmax.xlane.f32.xlu0 %v549
        %v551 = vpop.xlane.xlu0 %550
        %v552 = vsub.f32 %v546, %v551
        %v553 = vmul.f32 %v552, 1.442695
        %v554 = vpow.pop %v553
        %v555 = vsel %vm472, %v554, 0.0
        %556 = vadd.xlane.f32.xlu0 %v555
        %v557 = vpop.xlane.xlu0 %556
        %v558 = vrcp.pop %v557
        %v559 = vmul.f32 %v554, %v558
        %v561 = vsel %vm472, %v559, 0
        %563 = vmatprep.subr.mxu0 0.0
        %564 = vmatpush1.msra.mxu0 %v471
        %565 = vmatprep.subr.mxu0 0.0
        %566 = vmatpush1.msra.mxu0 0.0
        %567 = vmatprep.subr.mxu0 0.0
        %568 = vmatpush1.msra.mxu0 0.0
        %569 = vmatprep.subr.mxu0 0.0
        %570 = vmatpush1.msra.mxu0 0.0
        %571 = vmatprep.subr.mxu0 0.0
        %572 = vmatpush1.msra.mxu0 0.0
        %573 = vmatprep.subr.mxu0 0.0
        %574 = vmatpush1.msra.mxu0 0.0
        %575 = vmatprep.subr.mxu0 0.0
        %576 = vmatpush1.msra.mxu0 0.0
        %577 = vmatprep.subr.mxu0 0.0
        %578 = vmatpush1.msra.mxu0 0.0
        %579 = vmatprep.subr.mxu0 0.0
        %580 = vmatpush1.msra.mxu0 0.0
        %581 = vmatprep.subr.mxu0 0.0
        %582 = vmatpush1.msra.mxu0 0.0
        %583 = vmatprep.subr.mxu0 0.0
        %584 = vmatpush1.msra.mxu0 0.0
        %585 = vmatprep.subr.mxu0 0.0
        %586 = vmatpush1.msra.mxu0 0.0
        %587 = vmatprep.subr.mxu0 0.0
        %588 = vmatpush1.msra.mxu0 0.0
        %589 = vmatprep.subr.mxu0 0.0
        %590 = vmatpush1.msra.mxu0 0.0
        %591 = vmatprep.subr.mxu0 0.0
        %592 = vmatpush1.msra.mxu0 0.0
        %593 = vmatprep.subr.mxu0 0.0
        %594 = vmatpush1.msra.mxu0 0.0
        %595 = vmatprep.subr.mxu0 0.0
        %596 = vmatpush1.msra.mxu0 0.0
        %597 = vmatprep.subr.mxu0 0.0
        %598 = vmatpush1.msra.mxu0 0.0
        %599 = vmatprep.subr.mxu0 0.0
        %600 = vmatpush1.msra.mxu0 0.0
        %601 = vmatprep.subr.mxu0 0.0
        %602 = vmatpush1.msra.mxu0 0.0
        %603 = vmatprep.subr.mxu0 0.0
        %604 = vmatpush1.msra.mxu0 0.0
        %605 = vmatprep.subr.mxu0 0.0
        %606 = vmatpush1.msra.mxu0 0.0
        %607 = vmatprep.subr.mxu0 0.0
        %608 = vmatpush1.msra.mxu0 0.0
        %609 = vmatprep.subr.mxu0 0.0
        %610 = vmatpush1.msra.mxu0 0.0
        %611 = vmatprep.subr.mxu0 0.0
        %612 = vmatpush1.msra.mxu0 0.0
        %613 = vmatprep.subr.mxu0 0.0
        %614 = vmatpush1.msra.mxu0 0.0
        %615 = vmatprep.subr.mxu0 0.0
        %616 = vmatpush1.msra.mxu0 0.0
        %617 = vmatprep.subr.mxu0 0.0
        %618 = vmatpush1.msra.mxu0 0.0
        %619 = vmatprep.subr.mxu0 0.0
        %620 = vmatpush1.msra.mxu0 0.0
        %621 = vmatprep.subr.mxu0 0.0
        %622 = vmatpush1.msra.mxu0 0.0
        %623 = vmatprep.subr.mxu0 0.0
        %624 = vmatpush1.msra.mxu0 0.0
        %625 = vmatprep.subr.mxu0 0.0
        %626 = vmatpush1.msra.mxu0 0.0
        %627 = vmatprep.mubr.f32.mxu0 0.0
        %628 = vmatmul.mubr.f32.gmra.mrb[0].mxu0 %v561
        %v629 = vpop.f32.mrb[0].mxu0
        %v630 = vadd.f32 0.0, %v629
        %v631 = vpop.f32.mrb[0].mxu0
        %632 = vdwg.mxu0
        %633 = vrot.lane.b32.xlu0 %v468, 120
        %v634 = vpop.permute.xlu0 %633
        %635 = vrot.lane.b32.xlu0 %v469, 120
        %v636 = vpop.permute.xlu0 %635
        %v637 = vsel %vm472, %v634, 0
        %v639 = vsel %vm472, %v636, 0
        %641 = vmatprep.subr.mxu0 0.0
        %642 = vmatpush1.xpose.msra.mxu0 %v639
        %643 = vmatprep.subr.mxu0 0.0
        %644 = vmatpush1.xpose.msra.mxu0 0.0
        %645 = vmatprep.subr.mxu0 0.0
        %646 = vmatpush1.xpose.msra.mxu0 0.0
        %647 = vmatprep.subr.mxu0 0.0
        %648 = vmatpush1.xpose.msra.mxu0 0.0
        %649 = vmatprep.subr.mxu0 0.0
        %650 = vmatpush1.xpose.msra.mxu0 0.0
        %651 = vmatprep.subr.mxu0 0.0
        %652 = vmatpush1.xpose.msra.mxu0 0.0
        %653 = vmatprep.subr.mxu0 0.0
        %654 = vmatpush1.xpose.msra.mxu0 0.0
        %655 = vmatprep.subr.mxu0 0.0
        %656 = vmatpush1.xpose.msra.mxu0 0.0
        %657 = vmatprep.subr.mxu0 0.0
        %658 = vmatpush1.xpose.msra.mxu0 0.0
        %659 = vmatprep.subr.mxu0 0.0
        %660 = vmatpush1.xpose.msra.mxu0 0.0
        %661 = vmatprep.subr.mxu0 0.0
        %662 = vmatpush1.xpose.msra.mxu0 0.0
        %663 = vmatprep.subr.mxu0 0.0
        %664 = vmatpush1.xpose.msra.mxu0 0.0
        %665 = vmatprep.subr.mxu0 0.0
        %666 = vmatpush1.xpose.msra.mxu0 0.0
        %667 = vmatprep.subr.mxu0 0.0
        %668 = vmatpush1.xpose.msra.mxu0 0.0
        %669 = vmatprep.subr.mxu0 0.0
        %670 = vmatpush1.xpose.msra.mxu0 0.0
        %671 = vmatprep.subr.mxu0 0.0
        %672 = vmatpush1.xpose.msra.mxu0 0.0
        %673 = vmatprep.subr.mxu0 0.0
        %674 = vmatpush1.xpose.msra.mxu0 0.0
        %675 = vmatprep.subr.mxu0 0.0
        %676 = vmatpush1.xpose.msra.mxu0 0.0
        %677 = vmatprep.subr.mxu0 0.0
        %678 = vmatpush1.xpose.msra.mxu0 0.0
        %679 = vmatprep.subr.mxu0 0.0
        %680 = vmatpush1.xpose.msra.mxu0 0.0
        %681 = vmatprep.subr.mxu0 0.0
        %682 = vmatpush1.xpose.msra.mxu0 0.0
        %683 = vmatprep.subr.mxu0 0.0
        %684 = vmatpush1.xpose.msra.mxu0 0.0
        %685 = vmatprep.subr.mxu0 0.0
        %686 = vmatpush1.xpose.msra.mxu0 0.0
        %687 = vmatprep.subr.mxu0 0.0
        %688 = vmatpush1.xpose.msra.mxu0 0.0
        %689 = vmatprep.subr.mxu0 0.0
        %690 = vmatpush1.xpose.msra.mxu0 0.0
        %691 = vmatprep.subr.mxu0 0.0
        %692 = vmatpush1.xpose.msra.mxu0 0.0
        %693 = vmatprep.subr.mxu0 0.0
        %694 = vmatpush1.xpose.msra.mxu0 0.0
        %695 = vmatprep.subr.mxu0 0.0
        %696 = vmatpush1.xpose.msra.mxu0 0.0
        %697 = vmatprep.subr.mxu0 0.0
        %698 = vmatpush1.xpose.msra.mxu0 0.0
        %699 = vmatprep.subr.mxu0 0.0
        %700 = vmatpush1.xpose.msra.mxu0 0.0
        %701 = vmatprep.subr.mxu0 0.0
        %702 = vmatpush1.xpose.msra.mxu0 0.0
        %703 = vmatprep.subr.mxu0 0.0
        %704 = vmatpush1.xpose.msra.mxu0 0.0
        %705 = vmatprep.mubr.f32.mxu0 0.0
        %706 = vmatmul.mubr.f32.gmra.mrb[0].mxu0 %v637
        %v707 = vpop.f32.mrb[0].mxu0
        %v708 = vadd.f32 0.0, %v707
        %v709 = vpop.f32.mrb[0].mxu0
        %710 = vdwg.mxu0
        %v711 = vsel %vm472, %v708, -inf
        %712 = vmax.xlane.f32.xlu0 %v711
        %v713 = vpop.xlane.xlu0 %712
        %v714 = vsub.f32 %v708, %v713
        %v715 = vmul.f32 %v714, 1.442695
        %v716 = vpow.pop %v715
        %v717 = vsel %vm472, %v716, 0.0
        %718 = vadd.xlane.f32.xlu0 %v717
        %v719 = vpop.xlane.xlu0 %718
        %v720 = vrcp.pop %v719
        %v721 = vmul.f32 %v716, %v720
        %723 = vrot.lane.b32.xlu0 %v471, 120
        %v724 = vpop.permute.xlu0 %723
        %v727 = vsel %vm472, %v721, 0
        %729 = vmatprep.subr.mxu0 0.0
        %730 = vmatpush1.msra.mxu0 %v724
        %731 = vmatprep.subr.mxu0 0.0
        %732 = vmatpush1.msra.mxu0 0.0
        %733 = vmatprep.subr.mxu0 0.0
        %734 = vmatpush1.msra.mxu0 0.0
        %735 = vmatprep.subr.mxu0 0.0
        %736 = vmatpush1.msra.mxu0 0.0
        %737 = vmatprep.subr.mxu0 0.0
        %738 = vmatpush1.msra.mxu0 0.0
        %739 = vmatprep.subr.mxu0 0.0
        %740 = vmatpush1.msra.mxu0 0.0
        %741 = vmatprep.subr.mxu0 0.0
        %742 = vmatpush1.msra.mxu0 0.0
        %743 = vmatprep.subr.mxu0 0.0
        %744 = vmatpush1.msra.mxu0 0.0
        %745 = vmatprep.subr.mxu0 0.0
        %746 = vmatpush1.msra.mxu0 0.0
        %747 = vmatprep.subr.mxu0 0.0
        %748 = vmatpush1.msra.mxu0 0.0
        %749 = vmatprep.subr.mxu0 0.0
        %750 = vmatpush1.msra.mxu0 0.0
        %751 = vmatprep.subr.mxu0 0.0
        %752 = vmatpush1.msra.mxu0 0.0
        %753 = vmatprep.subr.mxu0 0.0
        %754 = vmatpush1.msra.mxu0 0.0
        %755 = vmatprep.subr.mxu0 0.0
        %756 = vmatpush1.msra.mxu0 0.0
        %757 = vmatprep.subr.mxu0 0.0
        %758 = vmatpush1.msra.mxu0 0.0
        %759 = vmatprep.subr.mxu0 0.0
        %760 = vmatpush1.msra.mxu0 0.0
        %761 = vmatprep.subr.mxu0 0.0
        %762 = vmatpush1.msra.mxu0 0.0
        %763 = vmatprep.subr.mxu0 0.0
        %764 = vmatpush1.msra.mxu0 0.0
        %765 = vmatprep.subr.mxu0 0.0
        %766 = vmatpush1.msra.mxu0 0.0
        %767 = vmatprep.subr.mxu0 0.0
        %768 = vmatpush1.msra.mxu0 0.0
        %769 = vmatprep.subr.mxu0 0.0
        %770 = vmatpush1.msra.mxu0 0.0
        %771 = vmatprep.subr.mxu0 0.0
        %772 = vmatpush1.msra.mxu0 0.0
        %773 = vmatprep.subr.mxu0 0.0
        %774 = vmatpush1.msra.mxu0 0.0
        %775 = vmatprep.subr.mxu0 0.0
        %776 = vmatpush1.msra.mxu0 0.0
        %777 = vmatprep.subr.mxu0 0.0
        %778 = vmatpush1.msra.mxu0 0.0
        %779 = vmatprep.subr.mxu0 0.0
        %780 = vmatpush1.msra.mxu0 0.0
        %781 = vmatprep.subr.mxu0 0.0
        %782 = vmatpush1.msra.mxu0 0.0
        %783 = vmatprep.subr.mxu0 0.0
        %784 = vmatpush1.msra.mxu0 0.0
        %785 = vmatprep.subr.mxu0 0.0
        %786 = vmatpush1.msra.mxu0 0.0
        %787 = vmatprep.subr.mxu0 0.0
        %788 = vmatpush1.msra.mxu0 0.0
        %789 = vmatprep.subr.mxu0 0.0
        %790 = vmatpush1.msra.mxu0 0.0
        %791 = vmatprep.subr.mxu0 0.0
        %792 = vmatpush1.msra.mxu0 0.0
        %793 = vmatprep.mubr.f32.mxu0 0.0
        %794 = vmatmul.mubr.f32.gmra.mrb[0].mxu0 %v727
        %v795 = vpop.f32.mrb[0].mxu0
        %v796 = vadd.f32 0.0, %v795
        %v797 = vpop.f32.mrb[0].mxu0
        %798 = vdwg.mxu0
        %799 = vrot.lane.b32.xlu0 %v468, 112
        %v800 = vpop.permute.xlu0 %799
        %801 = vrot.lane.b32.xlu0 %v469, 112
        %v802 = vpop.permute.xlu0 %801
        %v803 = vsel %vm472, %v800, 0
        %v805 = vsel %vm472, %v802, 0
        %807 = vmatprep.subr.mxu0 0.0
        %808 = vmatpush1.xpose.msra.mxu0 %v805
        %809 = vmatprep.subr.mxu0 0.0
        %810 = vmatpush1.xpose.msra.mxu0 0.0
        %811 = vmatprep.subr.mxu0 0.0
        %812 = vmatpush1.xpose.msra.mxu0 0.0
        %813 = vmatprep.subr.mxu0 0.0
        %814 = vmatpush1.xpose.msra.mxu0 0.0
        %815 = vmatprep.subr.mxu0 0.0
        %816 = vmatpush1.xpose.msra.mxu0 0.0
        %817 = vmatprep.subr.mxu0 0.0
        %818 = vmatpush1.xpose.msra.mxu0 0.0
        %819 = vmatprep.subr.mxu0 0.0
        %820 = vmatpush1.xpose.msra.mxu0 0.0
        %821 = vmatprep.subr.mxu0 0.0
        %822 = vmatpush1.xpose.msra.mxu0 0.0
        %823 = vmatprep.subr.mxu0 0.0
        %824 = vmatpush1.xpose.msra.mxu0 0.0
        %825 = vmatprep.subr.mxu0 0.0
        %826 = vmatpush1.xpose.msra.mxu0 0.0
        %827 = vmatprep.subr.mxu0 0.0
        %828 = vmatpush1.xpose.msra.mxu0 0.0
        %829 = vmatprep.subr.mxu0 0.0
        %830 = vmatpush1.xpose.msra.mxu0 0.0
        %831 = vmatprep.subr.mxu0 0.0
        %832 = vmatpush1.xpose.msra.mxu0 0.0
        %833 = vmatprep.subr.mxu0 0.0
        %834 = vmatpush1.xpose.msra.mxu0 0.0
        %835 = vmatprep.subr.mxu0 0.0
        %836 = vmatpush1.xpose.msra.mxu0 0.0
        %837 = vmatprep.subr.mxu0 0.0
        %838 = vmatpush1.xpose.msra.mxu0 0.0
        %839 = vmatprep.subr.mxu0 0.0
        %840 = vmatpush1.xpose.msra.mxu0 0.0
        %841 = vmatprep.subr.mxu0 0.0
        %842 = vmatpush1.xpose.msra.mxu0 0.0
        %843 = vmatprep.subr.mxu0 0.0
        %844 = vmatpush1.xpose.msra.mxu0 0.0
        %845 = vmatprep.subr.mxu0 0.0
        %846 = vmatpush1.xpose.msra.mxu0 0.0
        %847 = vmatprep.subr.mxu0 0.0
        %848 = vmatpush1.xpose.msra.mxu0 0.0
        %849 = vmatprep.subr.mxu0 0.0
        %850 = vmatpush1.xpose.msra.mxu0 0.0
        %851 = vmatprep.subr.mxu0 0.0
        %852 = vmatpush1.xpose.msra.mxu0 0.0
        %853 = vmatprep.subr.mxu0 0.0
        %854 = vmatpush1.xpose.msra.mxu0 0.0
        %855 = vmatprep.subr.mxu0 0.0
        %856 = vmatpush1.xpose.msra.mxu0 0.0
        %857 = vmatprep.subr.mxu0 0.0
        %858 = vmatpush1.xpose.msra.mxu0 0.0
        %859 = vmatprep.subr.mxu0 0.0
        %860 = vmatpush1.xpose.msra.mxu0 0.0
        %861 = vmatprep.subr.mxu0 0.0
        %862 = vmatpush1.xpose.msra.mxu0 0.0
        %863 = vmatprep.subr.mxu0 0.0
        %864 = vmatpush1.xpose.msra.mxu0 0.0
        %865 = vmatprep.subr.mxu0 0.0
        %866 = vmatpush1.xpose.msra.mxu0 0.0
        %867 = vmatprep.subr.mxu0 0.0
        %868 = vmatpush1.xpose.msra.mxu0 0.0
        %869 = vmatprep.subr.mxu0 0.0
        %870 = vmatpush1.xpose.msra.mxu0 0.0
        %871 = vmatprep.mubr.f32.mxu0 0.0
        %872 = vmatmul.mubr.f32.gmra.mrb[0].mxu0 %v803
        %v873 = vpop.f32.mrb[0].mxu0
        %v874 = vadd.f32 0.0, %v873
        %v875 = vpop.f32.mrb[0].mxu0
        %876 = vdwg.mxu0
        %v877 = vsel %vm472, %v874, -inf
        %878 = vmax.xlane.f32.xlu0 %v877
        %v879 = vpop.xlane.xlu0 %878
        %v880 = vsub.f32 %v874, %v879
        %v881 = vmul.f32 %v880, 1.442695
        %v882 = vpow.pop %v881
        %v883 = vsel %vm472, %v882, 0.0
        %884 = vadd.xlane.f32.xlu0 %v883
        %v885 = vpop.xlane.xlu0 %884
        %v886 = vrcp.pop %v885
        %v887 = vmul.f32 %v882, %v886
        %888 = vrot.lane.b32.xlu0 %v471, 112
        %v889 = vpop.permute.xlu0 %888
        %v892 = vsel %vm472, %v887, 0
        %894 = vmatprep.subr.mxu0 0.0
        %895 = vmatpush1.msra.mxu0 %v889
        %896 = vmatprep.subr.mxu0 0.0
        %897 = vmatpush1.msra.mxu0 0.0
        %898 = vmatprep.subr.mxu0 0.0
        %899 = vmatpush1.msra.mxu0 0.0
        %900 = vmatprep.subr.mxu0 0.0
        %901 = vmatpush1.msra.mxu0 0.0
        %902 = vmatprep.subr.mxu0 0.0
        %903 = vmatpush1.msra.mxu0 0.0
        %904 = vmatprep.subr.mxu0 0.0
        %905 = vmatpush1.msra.mxu0 0.0
        %906 = vmatprep.subr.mxu0 0.0
        %907 = vmatpush1.msra.mxu0 0.0
        %908 = vmatprep.subr.mxu0 0.0
        %909 = vmatpush1.msra.mxu0 0.0
        %910 = vmatprep.subr.mxu0 0.0
        %911 = vmatpush1.msra.mxu0 0.0
        %912 = vmatprep.subr.mxu0 0.0
        %913 = vmatpush1.msra.mxu0 0.0
        %914 = vmatprep.subr.mxu0 0.0
        %915 = vmatpush1.msra.mxu0 0.0
        %916 = vmatprep.subr.mxu0 0.0
        %917 = vmatpush1.msra.mxu0 0.0
        %918 = vmatprep.subr.mxu0 0.0
        %919 = vmatpush1.msra.mxu0 0.0
        %920 = vmatprep.subr.mxu0 0.0
        %921 = vmatpush1.msra.mxu0 0.0
        %922 = vmatprep.subr.mxu0 0.0
        %923 = vmatpush1.msra.mxu0 0.0
        %924 = vmatprep.subr.mxu0 0.0
        %925 = vmatpush1.msra.mxu0 0.0
        %926 = vmatprep.subr.mxu0 0.0
        %927 = vmatpush1.msra.mxu0 0.0
        %928 = vmatprep.subr.mxu0 0.0
        %929 = vmatpush1.msra.mxu0 0.0
        %930 = vmatprep.subr.mxu0 0.0
        %931 = vmatpush1.msra.mxu0 0.0
        %932 = vmatprep.subr.mxu0 0.0
        %933 = vmatpush1.msra.mxu0 0.0
        %934 = vmatprep.subr.mxu0 0.0
        %935 = vmatpush1.msra.mxu0 0.0
        %936 = vmatprep.subr.mxu0 0.0
        %937 = vmatpush1.msra.mxu0 0.0
        %938 = vmatprep.subr.mxu0 0.0
        %939 = vmatpush1.msra.mxu0 0.0
        %940 = vmatprep.subr.mxu0 0.0
        %941 = vmatpush1.msra.mxu0 0.0
        %942 = vmatprep.subr.mxu0 0.0
        %943 = vmatpush1.msra.mxu0 0.0
        %944 = vmatprep.subr.mxu0 0.0
        %945 = vmatpush1.msra.mxu0 0.0
        %946 = vmatprep.subr.mxu0 0.0
        %947 = vmatpush1.msra.mxu0 0.0
        %948 = vmatprep.subr.mxu0 0.0
        %949 = vmatpush1.msra.mxu0 0.0
        %950 = vmatprep.subr.mxu0 0.0
        %951 = vmatpush1.msra.mxu0 0.0
        %952 = vmatprep.subr.mxu0 0.0
        %953 = vmatpush1.msra.mxu0 0.0
        %954 = vmatprep.subr.mxu0 0.0
        %955 = vmatpush1.msra.mxu0 0.0
        %956 = vmatprep.subr.mxu0 0.0
        %957 = vmatpush1.msra.mxu0 0.0
        %958 = vmatprep.mubr.f32.mxu0 0.0
        %959 = vmatmul.mubr.f32.gmra.mrb[0].mxu0 %v892
        %v960 = vpop.f32.mrb[0].mxu0
        %v961 = vadd.f32 0.0, %v960
        %v962 = vpop.f32.mrb[0].mxu0
        %963 = vdwg.mxu0
        %964 = vrot.lane.b32.xlu0 %v468, 104
        %v965 = vpop.permute.xlu0 %964
        %966 = vrot.lane.b32.xlu0 %v469, 104
        %v967 = vpop.permute.xlu0 %966
        %v968 = vsel %vm472, %v965, 0
        %v970 = vsel %vm472, %v967, 0
        %972 = vmatprep.subr.mxu0 0.0
        %973 = vmatpush1.xpose.msra.mxu0 %v970
        %974 = vmatprep.subr.mxu0 0.0
        %975 = vmatpush1.xpose.msra.mxu0 0.0
        %976 = vmatprep.subr.mxu0 0.0
        %977 = vmatpush1.xpose.msra.mxu0 0.0
        %978 = vmatprep.subr.mxu0 0.0
        %979 = vmatpush1.xpose.msra.mxu0 0.0
        %980 = vmatprep.subr.mxu0 0.0
        %981 = vmatpush1.xpose.msra.mxu0 0.0
        %982 = vmatprep.subr.mxu0 0.0
        %983 = vmatpush1.xpose.msra.mxu0 0.0
        %984 = vmatprep.subr.mxu0 0.0
        %985 = vmatpush1.xpose.msra.mxu0 0.0
        %986 = vmatprep.subr.mxu0 0.0
        %987 = vmatpush1.xpose.msra.mxu0 0.0
        %988 = vmatprep.subr.mxu0 0.0
        %989 = vmatpush1.xpose.msra.mxu0 0.0
        %990 = vmatprep.subr.mxu0 0.0
        %991 = vmatpush1.xpose.msra.mxu0 0.0
        %992 = vmatprep.subr.mxu0 0.0
        %993 = vmatpush1.xpose.msra.mxu0 0.0
        %994 = vmatprep.subr.mxu0 0.0
        %995 = vmatpush1.xpose.msra.mxu0 0.0
        %996 = vmatprep.subr.mxu0 0.0
        %997 = vmatpush1.xpose.msra.mxu0 0.0
        %998 = vmatprep.subr.mxu0 0.0
        %999 = vmatpush1.xpose.msra.mxu0 0.0
        %1000 = vmatprep.subr.mxu0 0.0
        %1001 = vmatpush1.xpose.msra.mxu0 0.0
        %1002 = vmatprep.subr.mxu0 0.0
        %1003 = vmatpush1.xpose.msra.mxu0 0.0
        %1004 = vmatprep.subr.mxu0 0.0
        %1005 = vmatpush1.xpose.msra.mxu0 0.0
        %1006 = vmatprep.subr.mxu0 0.0
        %1007 = vmatpush1.xpose.msra.mxu0 0.0
        %1008 = vmatprep.subr.mxu0 0.0
        %1009 = vmatpush1.xpose.msra.mxu0 0.0
        %1010 = vmatprep.subr.mxu0 0.0
        %1011 = vmatpush1.xpose.msra.mxu0 0.0
        %1012 = vmatprep.subr.mxu0 0.0
        %1013 = vmatpush1.xpose.msra.mxu0 0.0
        %1014 = vmatprep.subr.mxu0 0.0
        %1015 = vmatpush1.xpose.msra.mxu0 0.0
        %1016 = vmatprep.subr.mxu0 0.0
        %1017 = vmatpush1.xpose.msra.mxu0 0.0
        %1018 = vmatprep.subr.mxu0 0.0
        %1019 = vmatpush1.xpose.msra.mxu0 0.0
        %1020 = vmatprep.subr.mxu0 0.0
        %1021 = vmatpush1.xpose.msra.mxu0 0.0
        %1022 = vmatprep.subr.mxu0 0.0
        %1023 = vmatpush1.xpose.msra.mxu0 0.0
        %1024 = vmatprep.subr.mxu0 0.0
        %1025 = vmatpush1.xpose.msra.mxu0 0.0
        %1026 = vmatprep.subr.mxu0 0.0
        %1027 = vmatpush1.xpose.msra.mxu0 0.0
        %1028 = vmatprep.subr.mxu0 0.0
        %1029 = vmatpush1.xpose.msra.mxu0 0.0
        %1030 = vmatprep.subr.mxu0 0.0
        %1031 = vmatpush1.xpose.msra.mxu0 0.0
        %1032 = vmatprep.subr.mxu0 0.0
        %1033 = vmatpush1.xpose.msra.mxu0 0.0
        %1034 = vmatprep.subr.mxu0 0.0
        %1035 = vmatpush1.xpose.msra.mxu0 0.0
        %1036 = vmatprep.mubr.f32.mxu0 0.0
        %1037 = vmatmul.mubr.f32.gmra.mrb[0].mxu0 %v968
        %v1038 = vpop.f32.mrb[0].mxu0
        %v1039 = vadd.f32 0.0, %v1038
        %v1040 = vpop.f32.mrb[0].mxu0
        %1041 = vdwg.mxu0
        %v1042 = vsel %vm472, %v1039, -inf
        %1043 = vmax.xlane.f32.xlu0 %v1042
        %v1044 = vpop.xlane.xlu0 %1043
        %v1045 = vsub.f32 %v1039, %v1044
        %v1046 = vmul.f32 %v1045, 1.442695
        %v1047 = vpow.pop %v1046
        %v1048 = vsel %vm472, %v1047, 0.0
        %1049 = vadd.xlane.f32.xlu0 %v1048
        %v1050 = vpop.xlane.xlu0 %1049
        %v1051 = vrcp.pop %v1050
        %v1052 = vmul.f32 %v1047, %v1051
        %1053 = vrot.lane.b32.xlu0 %v471, 104
        %v1054 = vpop.permute.xlu0 %1053
        %v1057 = vsel %vm472, %v1052, 0
        %1059 = vmatprep.subr.mxu0 0.0
        %1060 = vmatpush1.msra.mxu0 %v1054
        %1061 = vmatprep.subr.mxu0 0.0
        %1062 = vmatpush1.msra.mxu0 0.0
        %1063 = vmatprep.subr.mxu0 0.0
        %1064 = vmatpush1.msra.mxu0 0.0
        %1065 = vmatprep.subr.mxu0 0.0
        %1066 = vmatpush1.msra.mxu0 0.0
        %1067 = vmatprep.subr.mxu0 0.0
        %1068 = vmatpush1.msra.mxu0 0.0
        %1069 = vmatprep.subr.mxu0 0.0
        %1070 = vmatpush1.msra.mxu0 0.0
        %1071 = vmatprep.subr.mxu0 0.0
        %1072 = vmatpush1.msra.mxu0 0.0
        %1073 = vmatprep.subr.mxu0 0.0
        %1074 = vmatpush1.msra.mxu0 0.0
        %1075 = vmatprep.subr.mxu0 0.0
        %1076 = vmatpush1.msra.mxu0 0.0
        %1077 = vmatprep.subr.mxu0 0.0
        %1078 = vmatpush1.msra.mxu0 0.0
        %1079 = vmatprep.subr.mxu0 0.0
        %1080 = vmatpush1.msra.mxu0 0.0
        %1081 = vmatprep.subr.mxu0 0.0
        %1082 = vmatpush1.msra.mxu0 0.0
        %1083 = vmatprep.subr.mxu0 0.0
        %1084 = vmatpush1.msra.mxu0 0.0
        %1085 = vmatprep.subr.mxu0 0.0
        %1086 = vmatpush1.msra.mxu0 0.0
        %1087 = vmatprep.subr.mxu0 0.0
        %1088 = vmatpush1.msra.mxu0 0.0
        %1089 = vmatprep.subr.mxu0 0.0
        %1090 = vmatpush1.msra.mxu0 0.0
        %1091 = vmatprep.subr.mxu0 0.0
        %1092 = vmatpush1.msra.mxu0 0.0
        %1093 = vmatprep.subr.mxu0 0.0
        %1094 = vmatpush1.msra.mxu0 0.0
        %1095 = vmatprep.subr.mxu0 0.0
        %1096 = vmatpush1.msra.mxu0 0.0
        %1097 = vmatprep.subr.mxu0 0.0
        %1098 = vmatpush1.msra.mxu0 0.0
        %1099 = vmatprep.subr.mxu0 0.0
        %1100 = vmatpush1.msra.mxu0 0.0
        %1101 = vmatprep.subr.mxu0 0.0
        %1102 = vmatpush1.msra.mxu0 0.0
        %1103 = vmatprep.subr.mxu0 0.0
        %1104 = vmatpush1.msra.mxu0 0.0
        %1105 = vmatprep.subr.mxu0 0.0
        %1106 = vmatpush1.msra.mxu0 0.0
        %1107 = vmatprep.subr.mxu0 0.0
        %1108 = vmatpush1.msra.mxu0 0.0
        %1109 = vmatprep.subr.mxu0 0.0
        %1110 = vmatpush1.msra.mxu0 0.0
        %1111 = vmatprep.subr.mxu0 0.0
        %1112 = vmatpush1.msra.mxu0 0.0
        %1113 = vmatprep.subr.mxu0 0.0
        %1114 = vmatpush1.msra.mxu0 0.0
        %1115 = vmatprep.subr.mxu0 0.0
        %1116 = vmatpush1.msra.mxu0 0.0
        %1117 = vmatprep.subr.mxu0 0.0
        %1118 = vmatpush1.msra.mxu0 0.0
        %1119 = vmatprep.subr.mxu0 0.0
        %1120 = vmatpush1.msra.mxu0 0.0
        %1121 = vmatprep.subr.mxu0 0.0
        %1122 = vmatpush1.msra.mxu0 0.0
        %1123 = vmatprep.mubr.f32.mxu0 0.0
        %1124 = vmatmul.mubr.f32.gmra.mrb[0].mxu0 %v1057
        %v1125 = vpop.f32.mrb[0].mxu0
        %v1126 = vadd.f32 0.0, %v1125
        %v1127 = vpop.f32.mrb[0].mxu0
        %1128 = vdwg.mxu0
        %1130 = vrot.lane.b32.xlu0 %v796, 8
        %v1131 = vpop.permute.xlu0 %1130
        %1134 = vrot.lane.b32.xlu0 %v961, 16
        %v1135 = vpop.permute.xlu0 %1134
        %1138 = vrot.lane.b32.xlu0 %v1126, 24
        %v1139 = vpop.permute.xlu0 %1138
        %v1141 = vsel %vm472, %v630, %v1131
        %vm1142 = vcmask 130048
        %v1143 = vsel %vm1142, %v1141, %v1135
        %vm1144 = vcmask 195584
        %v1145 = vsel %vm1144, %v1143, %v1139
        %1146 = vst.msk [vmem:[%s282] sm:$0xff] %vm394, %v1145
        %s1147 = sand.u32 %s155, 1
        %s1148 = scalar_lea.sflag [#allocation5], %s1147
        %s1149 = sand.u32 %s155, 1
        %s1150 = smul.addr %s1149, 8
        %s1151 = scalar_lea.vmem [#allocation9], %s1150
        // Predicated region
        $region57: #{tpu_custom_call.1} parent=39 // pred_check
          %p1152 = pneg %p165
        $region58: #{tpu_custom_call.1} parent=39 // pred_check_branch
          %1154 = sbr.rel (%p1152) target = $region60
        $region59: #{tpu_custom_call.1} parent=39 // pred_region
          %s1156 = ssub.s32 128, 128
          %1157 = vsyncadd %s1148, %s1156
          %s1158 = sadd.s32 %s28, %s27
          %s1159 = smul.addr %s1158, 128
          %s1160 = scalar_lea.hbm %s5, %s1159
          %s1162 = sshll.u32 %s1151, 4
          %s1163 = int_to_ptr.vmem [resolvable:$true] %s1162
          %1165 = dma.vmem_to_hbm [thread:$0]  %s1163, 128, %s1160, %s1148
        $region60: #{tpu_custom_call.1} parent=39 // pred_fallthru
          _
      $region40: #{tpu_custom_call.1} parent=5 // pred_fallthru
        _
      %p1166 = scmp.le.s32.totalorder 2, %s18
      // Predicated region
      $region61: #{tpu_custom_call.1} parent=5 // pred_check
        %p1167 = pneg %p1166
      $region62: #{tpu_custom_call.1} parent=5 // pred_check_branch
        %1169 = sbr.rel (%p1167) target = $region64
      $region63: #{tpu_custom_call.1} parent=5 // pred_region
        %s1170 = ssub.s32 %s18, 2
        // Predicated region
        $region65: #{tpu_custom_call.1} parent=63 // pred_check
          %p1171 = pneg %p171
        $region66: #{tpu_custom_call.1} parent=63 // pred_check_branch
          %1173 = sbr.rel (%p1171) target = $region68
        $region67: #{tpu_custom_call.1} parent=63 // pred_region
          %s1174 = sand.u32 %s156, 1
          %s1175 = scalar_lea.sflag [#allocation5], %s1174
          %s1176 = sand.u32 %s156, 1
          %s1177 = smul.addr %s1176, 8
          %s1178 = scalar_lea.vmem [#allocation9], %s1177
          %1179 = dma.done %s1175, 128
        $region68: #{tpu_custom_call.1} parent=63 // pred_fallthru
          _
      $region64: #{tpu_custom_call.1} parent=5 // pred_fallthru
        _
    $region6: #{tpu_custom_call.1} parent=1 // loop_footer
      %s22 = sadd.s32 1, %s18
    $region7: #{tpu_custom_call.1} parent=1 // loop_footer_branch
      %17 = sbr.rel target = $region3
    $region8: #{tpu_custom_call.1} parent=1 // loop_exit
      _
    %1180 = vsyncpa [#allocation4], 1
    %s1181 = scalar_lea.sflag [#allocation4], 1
    %1182 = vsyncpa %s1181, 1
    %1183 = vsyncpa [#allocation7], 1
    %1184 = vsyncpa [#allocation5], 1
    %s1185 = scalar_lea.sflag [#allocation5], 1
    %1186 = vsyncpa %s1185, 1

</llo_original>
